<compile_context>
chip_gen: v6e
topology: v6e:2x2x1
jax: 0.10.0
libtpu: 0.0.40
codegen_flags: <defaults>
</compile_context>

<pallas_src>
import jax
import jax.numpy as jnp
from jax.experimental import pallas as pl
from jax.experimental.pallas import tpu as pltpu


def _maxpool_agg_kernel(neigh_ref, w_ref, b_ref, out_ref, acc_ref):
    # neigh_ref: (tile_n, d_in)     one neighbor slot of this node tile
    # w_ref:     (d_in, d_out_pad)  full weight (resident: constant index_map)
    # b_ref:     (1, d_out_pad)     full bias
    # out_ref:   (tile_n, d_out_pad)
    # acc_ref:   (tile_n, d_out_pad) f32 running max of raw matmul outputs
    k = pl.program_id(1)

    h = jnp.dot(neigh_ref[...], w_ref[...], preferred_element_type=jnp.float32)

    @pl.when(k == 0)
    def _():
        acc_ref[...] = h

    @pl.when(k > 0)
    def _():
        acc_ref[...] = jnp.maximum(acc_ref[...], h)

    @pl.when(k == pl.num_programs(1) - 1)
    def _():
        # Bias + ReLU hoisted out of the per-neighbor loop (exact transform).
        out_ref[...] = jnp.maximum(
            acc_ref[...] + b_ref[...], 0.0
        ).astype(out_ref.dtype)


def _round_up(x, m):
    return ((x + m - 1) // m) * m


def maxpool_agg(x, neigh, weight, bias, *, tile_n=256):
    """GraphSAGE max-pool aggregation.

    x:      [N, D_in]       (unused by the pooling aggregation, kept for parity)
    neigh:  [N, K, D_in]
    weight: [D_in, D_out]   (torch Linear weight is [D_out, D_in]; pass transpose)
    bias:   [D_out]
    returns [N, D_out]
    """
    del x  # not consumed by the max-pool aggregator
    n, k, d_in = neigh.shape
    d_out = weight.shape[1]

    # Lane-dense output: pad D_out up to a multiple of 128 (zero weight
    # columns / zero bias -> padded outputs are ReLU(0)=0, sliced off below).
    d_out_pad = _round_up(d_out, 128)
    if d_out_pad != d_out:
        weight = jnp.pad(weight, ((0, 0), (0, d_out_pad - d_out)))
        bias = jnp.pad(bias, (0, d_out_pad - d_out))
    bias2d = bias.reshape(1, d_out_pad)

    # Node tiling: large tiles, N padded up to a tile multiple.
    tile_n = min(tile_n, _round_up(n, 8))
    n_pad = _round_up(n, tile_n)

    # Neighbor-major layout: each grid step streams one contiguous
    # (tile_n, d_in) LHS slab for a single neighbor slot.
    neigh_t = jnp.transpose(neigh, (1, 0, 2))
    if n_pad != n:
        neigh_t = jnp.pad(neigh_t, ((0, 0), (0, n_pad - n), (0, 0)))

    grid = (n_pad // tile_n, k)

    # Explicit VMEM budget: double-buffered blocks + f32 accumulator.
    itemsize = neigh.dtype.itemsize
    need = (
        2 * tile_n * d_in * itemsize            # neigh stream (double-buffered)
        + 2 * d_in * d_out_pad * itemsize       # weight
        + 2 * d_out_pad * itemsize              # bias
        + 2 * tile_n * d_out_pad * itemsize     # output
        + tile_n * d_out_pad * 4                # f32 accumulator scratch
    )
    vmem_limit = int(min(64 * 1024 * 1024, max(32 * 1024 * 1024, 2 * need)))

    out = pl.pallas_call(
        _maxpool_agg_kernel,
        out_shape=jax.ShapeDtypeStruct((n_pad, d_out_pad), neigh.dtype),
        grid_spec=pltpu.PrefetchScalarGridSpec(
            num_scalar_prefetch=0,
            grid=grid,
            in_specs=[
                # K-axis squeezed out: kernel sees a clean (tile_n, d_in) block.
                pl.BlockSpec((None, tile_n, d_in), lambda i, kk: (kk, i, 0)),
                pl.BlockSpec((d_in, d_out_pad), lambda i, kk: (0, 0)),
                pl.BlockSpec((1, d_out_pad), lambda i, kk: (0, 0)),
            ],
            out_specs=pl.BlockSpec((tile_n, d_out_pad), lambda i, kk: (i, 0)),
            scratch_shapes=[pltpu.VMEM((tile_n, d_out_pad), jnp.float32)],
        ),
        compiler_params=pltpu.CompilerParams(
            dimension_semantics=("parallel", "arbitrary"),
            vmem_limit_bytes=vmem_limit,
        ),
    )(neigh_t, weight, bias2d)

    return out[:n, :d_out]


def maxpool_agg_ref(x, neigh, weight, bias):
    """Pure-JAX reference of the same forward pass."""
    h = jnp.maximum(jnp.einsum("nkd,df->nkf", neigh, weight) + bias, 0.0)
    return jnp.max(h, axis=1).astype(neigh.dtype)


if __name__ == "__main__":
    # Small deterministic example: N nodes, K neighbors each.
    N, K = 16, 4
    IN_FEATS, OUT_FEATS = 32, 64

    key = jax.random.PRNGKey(0)
    kx, kn, kw, kb = jax.random.split(key, 4)

    x = jax.random.normal(kx, (N, IN_FEATS), dtype=jnp.float32)
    neigh = jax.random.normal(kn, (N, K, IN_FEATS), dtype=jnp.float32)

    # torch Linear weight is [out, in]; we store the transposed [in, out]
    # layout directly for the kernel.
    weight = jax.random.normal(kw, (IN_FEATS, OUT_FEATS), dtype=jnp.float32) * 0.1
    bias = jax.random.normal(kb, (OUT_FEATS,), dtype=jnp.float32) * 0.01

    out = maxpool_agg(x, neigh, weight, bias)
    out = jax.block_until_ready(out)

    ref = maxpool_agg_ref(x, neigh, weight, bias)
    assert out.shape == (N, OUT_FEATS)
    assert jnp.allclose(out, ref, atol=1e-5, rtol=1e-5)

    print("KERNEL_OK")
</pallas_src>

<mosaic_0001>
module attributes {stable_mosaic.version = 11 : i64} {
  func.func @_maxpool_agg_kernel(%arg0: i32, %arg1: i32, %arg2: memref<1x16x32xf32, #tpu.memory_space<vmem>>, %arg3: memref<32x128xf32, #tpu.memory_space<vmem>>, %arg4: memref<1x128xf32, #tpu.memory_space<vmem>>, %arg5: memref<16x128xf32, #tpu.memory_space<vmem>>, %arg6: memref<16x128xf32, #tpu.memory_space<vmem>>) attributes {dimension_semantics = [#tpu.dimension_semantics<parallel>, #tpu.dimension_semantics<arbitrary>], iteration_bounds = array<i64: 1, 4>, scalar_prefetch = 0 : i64, scratch_operands = 1 : i64, tpu.core_type = #tpu.core_type<tc>, window_params = [{transform_indices = @transform_0, window_bounds = array<i64: 1, 16, 32>}, {pipeline_mode = #tpu.pipeline_mode<synchronous>, transform_indices = @transform_1, window_bounds = array<i64: 32, 128>}, {pipeline_mode = #tpu.pipeline_mode<synchronous>, transform_indices = @transform_2, window_bounds = array<i64: 1, 128>}, {transform_indices = @transform_3, window_bounds = array<i64: 16, 128>}]} {
    %c0 = arith.constant 0 : index
    %c0_0 = arith.constant 0 : index
    %c0_1 = arith.constant 0 : index
    %0 = vector.load %arg2[%c0, %c0_0, %c0_1] : memref<1x16x32xf32, #tpu.memory_space<vmem>>, vector<1x16x32xf32>
    %1 = vector.shape_cast %0 : vector<1x16x32xf32> to vector<16x32xf32>
    %c0_2 = arith.constant 0 : index
    %c0_3 = arith.constant 0 : index
    %2 = vector.load %arg3[%c0_2, %c0_3] : memref<32x128xf32, #tpu.memory_space<vmem>>, vector<32x128xf32>
    %cst = arith.constant dense<0.000000e+00> : vector<16x128xf32>
    %3 = tpu.matmul %1, %2, %cst {dimension_numbers = #tpu.dot_dimension_numbers<[1], [0], [0], [1], [0, 0, 1, 1], [], []>} : vector<16x32xf32>, vector<32x128xf32>, vector<16x128xf32> -> vector<16x128xf32>
    %c0_i32 = arith.constant 0 : i32
    %4 = arith.cmpi eq, %arg1, %c0_i32 : i32
    %5 = arith.extui %4 : i1 to i32
    %c0_i32_4 = arith.constant 0 : i32
    %6 = arith.cmpi ne, %5, %c0_i32_4 : i32
    scf.if %6 {
      %c0_8 = arith.constant 0 : index
      %c0_9 = arith.constant 0 : index
      %13 = vector.load %arg6[%c0_8, %c0_9] : memref<16x128xf32, #tpu.memory_space<vmem>>, vector<16x128xf32>
      tpu.vector_store %arg6[%c0_8, %c0_9], %3 {strides = array<i32>} : memref<16x128xf32, #tpu.memory_space<vmem>>, vector<16x128xf32>,
    } else {
    }
    %c0_i32_5 = arith.constant 0 : i32
    %7 = arith.cmpi sgt, %arg1, %c0_i32_5 : i32
    %8 = arith.extui %7 : i1 to i32
    %c0_i32_6 = arith.constant 0 : i32
    %9 = arith.cmpi ne, %8, %c0_i32_6 : i32
    scf.if %9 {
      %c0_8 = arith.constant 0 : index
      %c0_9 = arith.constant 0 : index
      %13 = vector.load %arg6[%c0_8, %c0_9] : memref<16x128xf32, #tpu.memory_space<vmem>>, vector<16x128xf32>
      %14 = arith.maximumf %13, %3 : vector<16x128xf32>
      %c0_10 = arith.constant 0 : index
      %c0_11 = arith.constant 0 : index
      %15 = vector.load %arg6[%c0_10, %c0_11] : memref<16x128xf32, #tpu.memory_space<vmem>>, vector<16x128xf32>
      tpu.vector_store %arg6[%c0_10, %c0_11], %14 {strides = array<i32>} : memref<16x128xf32, #tpu.memory_space<vmem>>, vector<16x128xf32>,
    } else {
    }
    %c3_i32 = arith.constant 3 : i32
    %10 = arith.cmpi eq, %arg1, %c3_i32 : i32
    %11 = arith.extui %10 : i1 to i32
    %c0_i32_7 = arith.constant 0 : i32
    %12 = arith.cmpi ne, %11, %c0_i32_7 : i32
    scf.if %12 {
      %c0_8 = arith.constant 0 : index
      %c0_9 = arith.constant 0 : index
      %13 = vector.load %arg6[%c0_8, %c0_9] : memref<16x128xf32, #tpu.memory_space<vmem>>, vector<16x128xf32>
      %c0_10 = arith.constant 0 : index
      %c0_11 = arith.constant 0 : index
      %14 = vector.load %arg4[%c0_10, %c0_11] : memref<1x128xf32, #tpu.memory_space<vmem>>, vector<1x128xf32>
      %15 = vector.broadcast %14 : vector<1x128xf32> to vector<16x128xf32>
      %16 = arith.addf %13, %15 : vector<16x128xf32>
      %cst_12 = arith.constant 0.000000e+00 : f32
      %17 = vector.broadcast %cst_12 : f32 to vector<16x128xf32>
      %18 = arith.maximumf %16, %17 : vector<16x128xf32>
      %c0_13 = arith.constant 0 : index
      %c0_14 = arith.constant 0 : index
      %19 = vector.load %arg5[%c0_13, %c0_14] : memref<16x128xf32, #tpu.memory_space<vmem>>, vector<16x128xf32>
      tpu.vector_store %arg5[%c0_13, %c0_14], %18 {strides = array<i32>} : memref<16x128xf32, #tpu.memory_space<vmem>>, vector<16x128xf32>,
    } else {
    }
    return
  }
  func.func @transform_0(%arg0: i32, %arg1: i32) -> (i32, i32, i32) {
    %c0_i32 = arith.constant 0 : i32
    %c0_i32_0 = arith.constant 0 : i32
    return %arg1, %arg0, %c0_i32 : i32, i32, i32
  }
  func.func @transform_1(%arg0: i32, %arg1: i32) -> (i32, i32) {
    %c0_i32 = arith.constant 0 : i32
    %c0_i32_0 = arith.constant 0 : i32
    %c0_i32_1 = arith.constant 0 : i32
    return %c0_i32, %c0_i32_0 : i32, i32
  }
  func.func @transform_2(%arg0: i32, %arg1: i32) -> (i32, i32) {
    %c0_i32 = arith.constant 0 : i32
    %c0_i32_0 = arith.constant 0 : i32
    %c0_i32_1 = arith.constant 0 : i32
    return %c0_i32, %c0_i32_0 : i32, i32
  }
  func.func @transform_3(%arg0: i32, %arg1: i32) -> (i32, i32) {
    %c0_i32 = arith.constant 0 : i32
    %c0_i32_0 = arith.constant 0 : i32
    return %arg0, %c0_i32 : i32, i32
  }
}

</mosaic_0001>

<llo_original>
// kernel: tpu_custom_call.1
$region0: #{tpu_custom_call.1}
  #allocation0 [shape = 'u32[]', space=smem, size = 0x4, offset = 0x4, fixed_abs, tag = 'smem constant byte address 0x4 - core index']
  #allocation1 [shape = 'u32[144,128]{1,0:T(1,128)}', space=vmem, size = 0x12000, scoped, tag = 'internal scratch']
  #allocation2 [shape = 'f32[16,128]{1,0:T(8,128)}', space=vmem, size = 0x2000, scoped, tag = 'scratch operand']
  %s0 = inlined_call_operand.hbm [shape: f32[4,16,32], index: 0, kind: input, shape index: {}]
  %s1 = inlined_call_operand.hbm [shape: f32[32,128], index: 1, kind: input, shape index: {}]
  %s2 = inlined_call_operand.vmem [shape: f32[1,128], index: 2, kind: input, shape index: {}]
  %s3 = inlined_call_operand.hbm [shape: f32[16,128], index: 3, kind: output, shape index: {}]
  %s4 = sld [smem:[#allocation0]]
  $region65: #{tpu_custom_call.1} parent=0
    _
  %s6 = ssub.s32 1, %s4
  %s7 = scalar_select 0, %s6, %s4
  $region1: #{tpu_custom_call.1} parent=0
    #allocation3 [shape = 'u8[16384]{0}', space=vmem, size = 0x4000, scoped, tag = 'input window, operand 0']
    #allocation4 [shape = 's32[2]{0}', space=sflag, size = 0x8, scoped, tag = 'scoped memory for tpu_custom_call.1']
    #allocation5 [shape = 's32[2]{0}', space=sflag, size = 0x8, scoped, tag = 'scoped memory for tpu_custom_call.1']
    #allocation6 [shape = 'u8[16384]{0}', space=vmem, size = 0x4000, scoped, tag = 'input window, operand 1, single buffered']
    #allocation7 [shape = 's32[1]{0}', space=sflag, size = 0x4, scoped, tag = 'scoped memory for tpu_custom_call.1']
    #allocation8 [shape = 'u8[8192]{0}', space=vmem, size = 0x2000, scoped, tag = 'output window, operand 0, single buffered']
    %8 = vsyncpa [#allocation4], 0
    %s9 = scalar_lea.sflag [#allocation4], 1
    %10 = vsyncpa %s9, 0
    %11 = vsyncpa [#allocation7], 0
    %12 = vsyncpa [#allocation5], 0
    loop: start=0, step=1, limit=6
    $region2: #{tpu_custom_call.1} parent=1 // loop_pre_header
      _
    $region3: #{tpu_custom_call.1} parent=1 // loop_header
      %s14 = sphi 0, %s18
      %p15 = scmp.ge.s32.totalorder %s14, 6
      %s21 = sphi 0, %s33
      %s22 = sphi 0, %s29
      %s23 = sphi 0, %s21
      %s24 = sphi 0, %s22
      %s25 = sphi 0, %s23
      %s26 = sphi 0, %s24
      %s38 = sphi 0, %s40
      %s41 = sphi 0, %s38
      %s42 = sphi 0, %s41
      %s58 = sphi 0, %s42
      %s62 = sphi 0, %s62
      %s64 = sphi 0, %s62
      %s65 = sphi 0, %s64
      %s79 = sphi 0, %s65
      %s83 = sphi 0, %s83
      %s85 = sphi 0, %s83
      %s86 = sphi 0, %s85
      %s100 = sphi 0, %s86
      %s106 = sphi 0, %s108
      %s109 = sphi 0, %s106
      %s110 = sphi 0, %s109
      %s126 = sphi 0, %s110
    $region4: #{tpu_custom_call.1} parent=1 // loop_header_branch
      %17 = sbr.rel (%p15) target = $region8
    $region5: #{tpu_custom_call.1} parent=1 // loop_body
      %s19 = ssub.s32 %s14, 1
      %s20 = ssub.s32 %s14, 2
      %s27 = sadd.s32 1, %s22
      %p28 = scmp.ge.s32.totalorder %s27, 4
      %s29 = scalar_select %p28, 0, %s27
      %s30 = sadd.s32 1, %s21
      %s31 = scalar_select %p28, %s30, %s21
      %p32 = scmp.ge.s32.totalorder %s31, 1
      %s33 = scalar_select %p32, 0, %s31
      %s34 = ssub.s32 %s22, %s29
      %s35 = ssub.s32 %s21, %s33
      %s36 = sor.u32 %s34, %s35
      %p37 = scmp.eq.s32.totalorder %s36, 0
      %s39 = sadd.s32 %s38, 1
      %s40 = scalar_select %p37, %s38, %s39
      %p43 = pneg %p37
      %p44 = scmp.eq.s32.totalorder %s14, 3
      %p45 = por %p43, %p44
      %p46 = scmp.ne.s32.totalorder %s38, %s41
      %p47 = scmp.eq.s32.totalorder %s14, 0
      %p48 = por %p46, %p47
      %p49 = scmp.ne.s32.totalorder %s38, %s41
      %p50 = scmp.eq.s32.totalorder %s19, 3
      %p51 = por %p49, %p50
      %p52 = scmp.ne.s32.totalorder %s41, %s42
      %p53 = scmp.eq.s32.totalorder %s19, 0
      %p54 = por %p52, %p53
      %p55 = scmp.ne.s32.totalorder %s41, %s42
      %p56 = scmp.eq.s32.totalorder %s20, 3
      %p57 = por %p55, %p56
      %p59 = scmp.ne.s32.totalorder %s42, %s58
      %p60 = scmp.eq.s32.totalorder %s20, 0
      %p61 = por %p59, %p60
      %s63 = sadd.s32 %s62, 1
      %p66 = scmp.eq.s32.totalorder %s14, 3
      %p67 = scmp.ne.s32.totalorder %s62, %s64
      %p68 = scmp.eq.s32.totalorder %s14, 0
      %p69 = por %p67, %p68
      %p70 = scmp.ne.s32.totalorder %s62, %s64
      %p71 = scmp.eq.s32.totalorder %s19, 3
      %p72 = por %p70, %p71
      %p73 = scmp.ne.s32.totalorder %s64, %s65
      %p74 = scmp.eq.s32.totalorder %s19, 0
      %p75 = por %p73, %p74
      %p76 = scmp.ne.s32.totalorder %s64, %s65
      %p77 = scmp.eq.s32.totalorder %s20, 3
      %p78 = por %p76, %p77
      %p80 = scmp.ne.s32.totalorder %s65, %s79
      %p81 = scmp.eq.s32.totalorder %s20, 0
      %p82 = por %p80, %p81
      %s84 = sadd.s32 %s83, 1
      %p87 = scmp.eq.s32.totalorder %s14, 3
      %p88 = scmp.ne.s32.totalorder %s83, %s85
      %p89 = scmp.eq.s32.totalorder %s14, 0
      %p90 = por %p88, %p89
      %p91 = scmp.ne.s32.totalorder %s83, %s85
      %p92 = scmp.eq.s32.totalorder %s19, 3
      %p93 = por %p91, %p92
      %p94 = scmp.ne.s32.totalorder %s85, %s86
      %p95 = scmp.eq.s32.totalorder %s19, 0
      %p96 = por %p94, %p95
      %p97 = scmp.ne.s32.totalorder %s85, %s86
      %p98 = scmp.eq.s32.totalorder %s20, 3
      %p99 = por %p97, %p98
      %p101 = scmp.ne.s32.totalorder %s86, %s100
      %p102 = scmp.eq.s32.totalorder %s20, 0
      %p103 = por %p101, %p102
      %s104 = ssub.s32 %s21, %s33
      %p105 = scmp.eq.s32.totalorder %s104, 0
      %s107 = sadd.s32 %s106, 1
      %s108 = scalar_select %p105, %s106, %s107
      %p111 = pneg %p105
      %p112 = scmp.eq.s32.totalorder %s14, 3
      %p113 = por %p111, %p112
      %p114 = scmp.ne.s32.totalorder %s106, %s109
      %p115 = scmp.eq.s32.totalorder %s14, 0
      %p116 = por %p114, %p115
      %p117 = scmp.ne.s32.totalorder %s106, %s109
      %p118 = scmp.eq.s32.totalorder %s19, 3
      %p119 = por %p117, %p118
      %p120 = scmp.ne.s32.totalorder %s109, %s110
      %p121 = scmp.eq.s32.totalorder %s19, 0
      %p122 = por %p120, %p121
      %p123 = scmp.ne.s32.totalorder %s109, %s110
      %p124 = scmp.eq.s32.totalorder %s20, 3
      %p125 = por %p123, %p124
      %p127 = scmp.ne.s32.totalorder %s110, %s126
      %p128 = scmp.eq.s32.totalorder %s20, 0
      %p129 = por %p127, %p128
      %p130 = scmp.le.s32.totalorder 1, %s14
      %p131 = scmp.lt.s32.totalorder %s14, 5
      %p132 = pnand %p130, %p131
      %p133 = pneg %p132
      // Predicated region
      $region9: #{tpu_custom_call.1} parent=5 // pred_check
        _
      $region10: #{tpu_custom_call.1} parent=5 // pred_check_branch
        %135 = sbr.rel (%p132) target = $region12
      $region11: #{tpu_custom_call.1} parent=5 // pred_region
        %s136 = ssub.s32 %s14, 1
        // Predicated region
        $region13: #{tpu_custom_call.1} parent=11 // pred_check
          %p137 = pneg %p75
        $region14: #{tpu_custom_call.1} parent=11 // pred_check_branch
          %139 = sbr.rel (%p137) target = $region16
        $region15: #{tpu_custom_call.1} parent=11 // pred_region
          %s141 = ssub.s32 512, 512
          %142 = vsyncadd [#allocation7], %s141
          %s143 = sshll.u32 [#allocation6], 4
          %s144 = int_to_ptr.vmem [resolvable:$true] %s143
          %149 = dma.hbm_to_vmem [thread:$0]  %s1, 512, %s144, [#allocation7], 128, 128, 8
        $region16: #{tpu_custom_call.1} parent=11 // pred_fallthru
          _
        // Predicated region
        $region17: #{tpu_custom_call.1} parent=11 // pred_check
          %p150 = pneg %p96
        $region18: #{tpu_custom_call.1} parent=11 // pred_check_branch
          %152 = sbr.rel (%p150) target = $region20
        $region19: #{tpu_custom_call.1} parent=11 // pred_region
          _
        $region20: #{tpu_custom_call.1} parent=11 // pred_fallthru
          _
      $region12: #{tpu_custom_call.1} parent=5 // pred_fallthru
        _
      %p153 = scmp.lt.s32.totalorder %s14, 4
      // Predicated region
      $region21: #{tpu_custom_call.1} parent=5 // pred_check
        %p154 = pneg %p153
      $region22: #{tpu_custom_call.1} parent=5 // pred_check_branch
        %156 = sbr.rel (%p154) target = $region24
      $region23: #{tpu_custom_call.1} parent=5 // pred_region
        // Predicated region
        $region25: #{tpu_custom_call.1} parent=23 // pred_check
          %p157 = pneg %p48
        $region26: #{tpu_custom_call.1} parent=23 // pred_check_branch
          %159 = sbr.rel (%p157) target = $region28
        $region27: #{tpu_custom_call.1} parent=23 // pred_region
          %s160 = sand.u32 %s38, 1
          %s161 = scalar_lea.sflag [#allocation4], %s160
          %s162 = sand.u32 %s38, 1
          %s163 = smul.addr %s162, 16
          %s164 = scalar_lea.vmem [#allocation3], %s163
          %s165 = smul.u32 2, %s21
          %s167 = ssub.s32 256, 256
          %168 = vsyncadd %s161, %s167
          %s169 = smul.addr %s22, 2
          %s170 = sadd.s32 %s165, %s169
          %s171 = smul.addr %s170, 128
          %s172 = scalar_lea.hbm %s0, %s171
          %s173 = sshll.u32 %s164, 4
          %s174 = int_to_ptr.vmem [resolvable:$true] %s173
          %179 = dma.hbm_to_vmem [thread:$0]  %s172, 256, %s174, %s161, 128, 128, 8
        $region28: #{tpu_custom_call.1} parent=23 // pred_fallthru
          _
      $region24: #{tpu_custom_call.1} parent=5 // pred_fallthru
        _
      %p180 = scmp.le.s32.totalorder 1, %s14
      %p181 = scmp.lt.s32.totalorder %s14, 5
      %p182 = pnand %p180, %p181
      %p183 = pneg %p182
      // Predicated region
      $region29: #{tpu_custom_call.1} parent=5 // pred_check
        _
      $region30: #{tpu_custom_call.1} parent=5 // pred_check_branch
        %185 = sbr.rel (%p182) target = $region32
      $region31: #{tpu_custom_call.1} parent=5 // pred_region
        %s186 = ssub.s32 %s14, 1
        %s187 = sand.u32 %s41, 1
        %s188 = scalar_lea.sflag [#allocation4], %s187
        %s189 = sand.u32 %s41, 1
        %s190 = smul.addr %s189, 16
        %s191 = scalar_lea.vmem [#allocation3], %s190
        // Predicated region
        $region33: #{tpu_custom_call.1} parent=31 // pred_check
          %p192 = pneg %p54
        $region34: #{tpu_custom_call.1} parent=31 // pred_check_branch
          %194 = sbr.rel (%p192) target = $region36
        $region35: #{tpu_custom_call.1} parent=31 // pred_region
          %195 = dma.done %s188, 256
        $region36: #{tpu_custom_call.1} parent=31 // pred_fallthru
          _
        // Predicated region
        $region37: #{tpu_custom_call.1} parent=31 // pred_check
          %p196 = pneg %p75
        $region38: #{tpu_custom_call.1} parent=31 // pred_check_branch
          %198 = sbr.rel (%p196) target = $region40
        $region39: #{tpu_custom_call.1} parent=31 // pred_region
          %199 = dma.done [#allocation7], 512
        $region40: #{tpu_custom_call.1} parent=31 // pred_fallthru
          _
        %s200 = sand.u32 %s41, 1
        %s201 = scalar_lea.sflag [#allocation4], %s200
        %s202 = sand.u32 %s41, 1
        %s203 = smul.addr %s202, 16
        %s204 = scalar_lea.vmem [#allocation3], %s203
        %p205 = pneg %p54
        %p206 = pneg %p51
        %p207 = pneg %p75
        %p208 = pneg %p72
        %p209 = pneg %p96
        %p210 = pneg %p93
        %p211 = pneg %p122
        %p212 = pneg %p119
        %s213 = smul.u32 2, %s23
        %s214 = smul.u32 2, %s23
        %v215 = vld [vmem:[%s191] sm:$0xff]
        %v216 = vld [vmem:[%s191 + $0x8] sm:$0xff]
        %v217 = vld [vmem:[#allocation6] sm:$0xff]
        %v218 = vld [vmem:[#allocation6 + $0x8] sm:$0xff]
        %v219 = vld [vmem:[#allocation6 + $0x10] sm:$0xff]
        %v220 = vld [vmem:[#allocation6 + $0x18] sm:$0xff]
        %vm221 = vcmask 261120
        %v223 = vsel %vm221, %v215, 0
        %v226 = vsel %vm221, %v216, 0
        %228 = vmatprep.subr.mxu0 0.0
        %229 = vmatpush1.msra.mxu0 0.0
        %230 = vmatprep.subr.mxu0 0.0
        %231 = vmatpush1.msra.mxu0 0.0
        %232 = vmatprep.subr.mxu0 0.0
        %233 = vmatpush1.msra.mxu0 0.0
        %234 = vmatprep.subr.mxu0 0.0
        %235 = vmatpush1.msra.mxu0 0.0
        %236 = vmatprep.subr.mxu0 0.0
        %237 = vmatpush1.msra.mxu0 0.0
        %238 = vmatprep.subr.mxu0 0.0
        %239 = vmatpush1.msra.mxu0 0.0
        %240 = vmatprep.subr.mxu0 0.0
        %241 = vmatpush1.msra.mxu0 0.0
        %242 = vmatprep.subr.mxu0 0.0
        %243 = vmatpush1.msra.mxu0 0.0
        %244 = vmatprep.subr.mxu0 0.0
        %245 = vmatpush1.msra.mxu0 0.0
        %246 = vmatprep.subr.mxu0 0.0
        %247 = vmatpush1.msra.mxu0 0.0
        %248 = vmatprep.subr.mxu0 0.0
        %249 = vmatpush1.msra.mxu0 0.0
        %250 = vmatprep.subr.mxu0 0.0
        %251 = vmatpush1.msra.mxu0 0.0
        %252 = vmatprep.subr.mxu0 0.0
        %253 = vmatpush1.msra.mxu0 %v220
        %254 = vmatprep.subr.mxu0 0.0
        %255 = vmatpush1.msra.mxu0 %v219
        %256 = vmatprep.subr.mxu0 0.0
        %257 = vmatpush1.msra.mxu0 %v218
        %258 = vmatprep.subr.mxu0 0.0
        %259 = vmatpush1.msra.mxu0 %v217
        %260 = vmatprep.subr.mxu0 0.0
        %261 = vmatpush2.msra.mxu0 0.0
        %262 = vmatprep.subr.mxu0 0.0
        %263 = vmatpush2.msra.mxu0 0.0
        %264 = vmatprep.subr.mxu0 0.0
        %265 = vmatpush2.msra.mxu0 0.0
        %266 = vmatprep.subr.mxu0 0.0
        %267 = vmatpush2.msra.mxu0 0.0
        %268 = vmatprep.subr.mxu0 0.0
        %269 = vmatpush2.msra.mxu0 0.0
        %270 = vmatprep.subr.mxu0 0.0
        %271 = vmatpush2.msra.mxu0 0.0
        %272 = vmatprep.subr.mxu0 0.0
        %273 = vmatpush2.msra.mxu0 0.0
        %274 = vmatprep.subr.mxu0 0.0
        %275 = vmatpush2.msra.mxu0 0.0
        %276 = vmatprep.subr.mxu0 0.0
        %277 = vmatpush2.msra.mxu0 0.0
        %278 = vmatprep.subr.mxu0 0.0
        %279 = vmatpush2.msra.mxu0 0.0
        %280 = vmatprep.subr.mxu0 0.0
        %281 = vmatpush2.msra.mxu0 0.0
        %282 = vmatprep.subr.mxu0 0.0
        %283 = vmatpush2.msra.mxu0 0.0
        %284 = vmatprep.subr.mxu0 0.0
        %285 = vmatpush2.msra.mxu0 0.0
        %286 = vmatprep.subr.mxu0 0.0
        %287 = vmatpush2.msra.mxu0 0.0
        %288 = vmatprep.subr.mxu0 0.0
        %289 = vmatpush2.msra.mxu0 0.0
        %290 = vmatprep.subr.mxu0 0.0
        %291 = vmatpush2.msra.mxu0 0.0
        %292 = vmatprep.mubr.f32.mxu0 0.0
        %293 = vmatmul.mubr.f32.gmra.mxu0 %v223
        %v294 = vpop.f32.mrf.mxu0
        %v295 = vadd.f32 0.0, %v294
        %v296 = vpop.f32.mrf.mxu0
        %297 = vmatprep.mubr.f32.mxu0 0.0
        %298 = vmatmul.mubr.f32.gmra.mxu0 %v226
        %v299 = vpop.f32.mrf.mxu0
        %v300 = vadd.f32 0.0, %v299
        %v301 = vpop.f32.mrf.mxu0
        %302 = vdwg.mxu0
        %p303 = scmp.eq.s32.totalorder %s24, 0
        // Predicated region
        $region41: #{tpu_custom_call.1} parent=31 // pred_check
          %p304 = pneg %p303
        $region42: #{tpu_custom_call.1} parent=31 // pred_check_branch
          %306 = sbr.rel (%p304) target = $region44
        $region43: #{tpu_custom_call.1} parent=31 // pred_region
          %307 = vst [vmem:[#allocation2] sm:$0xff] %v295
          %308 = vst [vmem:[#allocation2 + $0x8] sm:$0xff] %v300
        $region44: #{tpu_custom_call.1} parent=31 // pred_fallthru
          _
        %p309 = scmp.gt.s32.totalorder %s24, 0
        // Predicated region
        $region45: #{tpu_custom_call.1} parent=31 // pred_check
          %p310 = pneg %p309
        $region46: #{tpu_custom_call.1} parent=31 // pred_check_branch
          %312 = sbr.rel (%p310) target = $region48
        $region47: #{tpu_custom_call.1} parent=31 // pred_region
          %v313 = vld [vmem:[#allocation2] sm:$0xff]
          %v314 = vld [vmem:[#allocation2 + $0x8] sm:$0xff]
          %v315 = vmax.f32 %v313, %v295
          %v316 = vmax.f32 %v314, %v300
          %317 = vst [vmem:[#allocation2] sm:$0xff] %v315
          %318 = vst [vmem:[#allocation2 + $0x8] sm:$0xff] %v316
        $region48: #{tpu_custom_call.1} parent=31 // pred_fallthru
          _
        %p319 = scmp.eq.s32.totalorder %s24, 3
        // Predicated region
        $region49: #{tpu_custom_call.1} parent=31 // pred_check
          %p320 = pneg %p319
        $region50: #{tpu_custom_call.1} parent=31 // pred_check_branch
          %322 = sbr.rel (%p320) target = $region52
        $region51: #{tpu_custom_call.1} parent=31 // pred_region
          %v323 = vld [vmem:[#allocation2] sm:$0xff]
          %v324 = vld [vmem:[#allocation2 + $0x8] sm:$0xff]
          %v325 = vld [vmem:[%s2] sm:$0x1]
          %v327 = vlaneseq
          %v328 = vshrl.u32 %v327, 7
          %v329 = vsub.s32 0, %v328
          %v330 = vrot.slane %v325, %v329
          %v332 = vadd.f32 %v323, %v330
          %v333 = vadd.f32 %v324, %v330
          %v334 = vmax.f32 %v332, 0.0
          %v335 = vmax.f32 %v333, 0.0
          %336 = vst [vmem:[#allocation8] sm:$0xff] %v334
          %337 = vst [vmem:[#allocation8 + $0x8] sm:$0xff] %v335
        $region52: #{tpu_custom_call.1} parent=31 // pred_fallthru
          _
        // Predicated region
        $region53: #{tpu_custom_call.1} parent=31 // pred_check
          %p338 = pneg %p119
        $region54: #{tpu_custom_call.1} parent=31 // pred_check_branch
          %340 = sbr.rel (%p338) target = $region56
        $region55: #{tpu_custom_call.1} parent=31 // pred_region
          %s341 = smul.u32 2, %s23
          %s343 = ssub.s32 256, 256
          %344 = vsyncadd [#allocation5], %s343
          %s345 = smul.addr %s341, 128
          %s346 = scalar_lea.hbm %s3, %s345
          %s347 = sshll.u32 [#allocation8], 4
          %s348 = int_to_ptr.vmem [resolvable:$true] %s347
          %353 = dma.vmem_to_hbm [thread:$0]  %s348, 256, %s346, [#allocation5], 128, 128, 8
        $region56: #{tpu_custom_call.1} parent=31 // pred_fallthru
          _
        // Predicated region
        $region57: #{tpu_custom_call.1} parent=31 // pred_check
          %p354 = pneg %p119
        $region58: #{tpu_custom_call.1} parent=31 // pred_check_branch
          %356 = sbr.rel (%p354) target = $region60
        $region59: #{tpu_custom_call.1} parent=31 // pred_region
          %357 = dma.done [#allocation5], 256
        $region60: #{tpu_custom_call.1} parent=31 // pred_fallthru
          _
      $region32: #{tpu_custom_call.1} parent=5 // pred_fallthru
        _
      %p358 = scmp.le.s32.totalorder 2, %s14
      // Predicated region
      $region61: #{tpu_custom_call.1} parent=5 // pred_check
        %p359 = pneg %p358
      $region62: #{tpu_custom_call.1} parent=5 // pred_check_branch
        %361 = sbr.rel (%p359) target = $region64
      $region63: #{tpu_custom_call.1} parent=5 // pred_region
        %s362 = ssub.s32 %s14, 2
      $region64: #{tpu_custom_call.1} parent=5 // pred_fallthru
        _
    $region6: #{tpu_custom_call.1} parent=1 // loop_footer
      %s18 = sadd.s32 1, %s14
    $region7: #{tpu_custom_call.1} parent=1 // loop_footer_branch
      %13 = sbr.rel target = $region3
    $region8: #{tpu_custom_call.1} parent=1 // loop_exit
      _
    %363 = vsyncpa [#allocation4], 1
    %s364 = scalar_lea.sflag [#allocation4], 1
    %365 = vsyncpa %s364, 1
    %366 = vsyncpa [#allocation7], 1
    %367 = vsyncpa [#allocation5], 1
    %s368 = scalar_lea.sflag [#allocation5], 1
    %369 = vsyncpa %s368, 1

</llo_original>
